<compile_context>
chip_gen: v7x
topology: tpu7x:2x2x1
jax: 0.10.0
libtpu: 0.0.40
codegen_flags: <defaults>
</compile_context>

<pallas_src>
import functools

import jax
import jax.numpy as jnp
from jax.experimental import pallas as pl
from jax.experimental.pallas import tpu as pltpu


def _round_up(x, m):
    return ((x + m - 1) // m) * m


# -----------------------------------------------------------------------------
# Kernel: one wide MXU matmul, split into (margins, out) at a 128-lane boundary.
# -----------------------------------------------------------------------------
def _hybrid_cbm_kernel(emb_ref, w_ref, b_ref, out_ref, dist_ref, *, cp):
    emb = emb_ref[...]                                         # (block_b, D)
    wide = (jnp.dot(emb, w_ref[...], preferred_element_type=jnp.float32)
            + b_ref[...])                                      # (block_b, Cp+Kp) f32
    dist_ref[...] = wide[:, :cp].astype(dist_ref.dtype)        # margins tile
    out_ref[...] = wide[:, cp:].astype(out_ref.dtype)          # logits tile


# -----------------------------------------------------------------------------
# One-time parameter folding / padding (hoisted out of the per-call path).
# -----------------------------------------------------------------------------
def prepare_hybrid_cbm_params(cavs, intercepts, norms, wc, bc, wr, br, *,
                              compute_dtype=jnp.bfloat16):
    """Fold norms/intercepts/biases into padded, MXU-ready weights.

    Args:
      cavs:       (C, D)      concept activation vectors
      intercepts: (C, 1)
      norms:      (C, 1)      (positive; 1/norm is baked into the weights)
      wc, bc:     (K, C), (K,)   bottleneck.classifier
      wr, br:     (K, D), (K,)   residual_classifier
      compute_dtype: dtype for the MXU operands (bf16 default; f32 for parity).
    Returns:
      dict of prepared params for `posthoc_hybrid_cbm_forward`.
    """
    f32 = jnp.float32
    C, D = cavs.shape
    K = wc.shape[0]

    inv_norms = (1.0 / norms.astype(f32)).reshape(1, C)              # (1, C)
    cavs_scaled = cavs.astype(f32).T * inv_norms                     # (D, C)
    icpt_scaled = intercepts.astype(f32).reshape(1, C) * inv_norms   # (1, C)
    wc_t = wc.astype(f32).T                                          # (C, K)
    w_comb = cavs_scaled @ wc_t + wr.astype(f32).T                   # (D, K)
    bias_comb = (icpt_scaled @ wc_t
                 + bc.astype(f32).reshape(1, K)
                 + br.astype(f32).reshape(1, K))                     # (1, K)

    # Lane-dense padding of the concept / class column blocks.
    Cp = _round_up(C, 128)
    Kp = _round_up(K, 128)
    Np = Cp + Kp

    w_all = jnp.zeros((D, Np), f32)
    w_all = w_all.at[:, :C].set(cavs_scaled)
    w_all = w_all.at[:, Cp:Cp + K].set(w_comb)
    b_all = jnp.zeros((1, Np), f32)
    b_all = b_all.at[:, :C].set(icpt_scaled)
    b_all = b_all.at[:, Cp:Cp + K].set(bias_comb)

    return dict(
        w_all=w_all.astype(compute_dtype),   # MXU operand
        b_all=b_all,                         # f32 bias (added post-accumulate)
        D=D, C=C, K=K, Cp=Cp, Kp=Kp,
        compute_dtype=compute_dtype,
    )


# -----------------------------------------------------------------------------
# Forward pass.
# -----------------------------------------------------------------------------
def posthoc_hybrid_cbm_forward(emb, params, *, block_b=128):
    """Pallas-backed forward of PosthocHybridCBM (always returns margins too).

    Args:
      emb:     (B, D) embeddings.
      params:  output of `prepare_hybrid_cbm_params`.
      block_b: batch tile (multiple of 8). 128 is a good default; use 256+ on
               v6e/v7x for large B (keep >=2 tiles so v7x's 2 TCs both work).
    Returns:
      (out, margins): (B, K) f32, (B, C) f32
    """
    B, D = emb.shape
    assert D == params["D"], "embedding dim mismatch with prepared params"
    C, K, Cp, Kp = params["C"], params["K"], params["Cp"], params["Kp"]
    Np = Cp + Kp
    w_all, b_all = params["w_all"], params["b_all"]
    mm_dtype = params["compute_dtype"]
    f32 = jnp.float32

    # Batch tiling: clamp the tile for small B so no padding is needed there;
    # only pad (one HBM copy) when B is not already a multiple of the tile.
    block_b = max(8, block_b - (block_b % 8))
    block_b_eff = min(block_b, _round_up(B, 8))
    Bp = _round_up(B, block_b_eff)
    emb_in = emb.astype(mm_dtype)
    if Bp != B:
        emb_in = jnp.pad(emb_in, ((0, Bp - B), (0, 0)))
    grid = (Bp // block_b_eff,)

    itemsize = jnp.dtype(mm_dtype).itemsize
    # VMEM budget: streamed emb tile (x2 buffers) + params (worst case x2
    # buffers) + two f32 output tiles (x2 buffers), with ~50% headroom.
    needed = (2 * block_b_eff * D * itemsize
              + 2 * D * Np * itemsize
              + 2 * 8 * Np * 4
              + 2 * block_b_eff * Np * 4)
    vmem_limit = int(min(max(needed * 3 // 2 + (2 << 20), 16 << 20), 128 << 20))

    cost = pl.CostEstimate(
        flops=2 * B * D * (C + K),
        transcendentals=0,
        bytes_accessed=int(B * D * itemsize          # emb read
                           + D * Np * itemsize       # weights read
                           + Np * 4                  # bias read
                           + B * Np * 4))            # outputs written

    kernel = functools.partial(_hybrid_cbm_kernel, cp=Cp)

    def make_call(single_buffer_params):
        # Constant-index param blocks are never re-DMA'd; single-buffering
        # them halves their VMEM footprint (important on v7x's 64 MiB VMEM).
        pm = {"pipeline_mode": pl.Buffered(1)} if single_buffer_params else {}
        return pl.pallas_call(
            kernel,
            out_shape=(
                jax.ShapeDtypeStruct((Bp, Kp), f32),   # class logits
                jax.ShapeDtypeStruct((Bp, Cp), f32),   # concept margins
            ),
            grid_spec=pltpu.PrefetchScalarGridSpec(
                num_scalar_prefetch=0,
                grid=grid,
                in_specs=[
                    pl.BlockSpec((block_b_eff, D), lambda i: (i, 0)),  # emb
                    pl.BlockSpec((D, Np), lambda i: (0, 0), **pm),     # w_all
                    pl.BlockSpec((1, Np), lambda i: (0, 0), **pm),     # b_all
                ],
                out_specs=[
                    pl.BlockSpec((block_b_eff, Kp), lambda i: (i, 0)),
                    pl.BlockSpec((block_b_eff, Cp), lambda i: (i, 0)),
                ],
            ),
            compiler_params=pltpu.CompilerParams(
                dimension_semantics=("parallel",),
                vmem_limit_bytes=vmem_limit),
            cost_estimate=cost,
        )

    try:
        out, dist = make_call(True)(emb_in, w_all, b_all)
    except Exception:
        # Fallback for jax versions that reject pl.Buffered(1) in the
        # automatic pipeline; double-buffered params are still correct.
        out, dist = make_call(False)(emb_in, w_all, b_all)

    # Strip column padding (and batch padding, if any).
    return out[:B, :K], dist[:B, :C]


# -----------------------------------------------------------------------------
# Pure-JAX reference mirroring the PyTorch forward exactly.
# -----------------------------------------------------------------------------
def reference_forward(emb, cavs, intercepts, norms, wc, bc, wr, br):
    margins = ((cavs @ emb.T + intercepts) / norms).T            # (B, C)
    out = margins @ wc.T + bc + emb @ wr.T + br                  # (B, K)
    return out, margins


if __name__ == "__main__":
    # Small, deterministic synthetic "concept bank" and classifiers.
    B = 8            # batch
    D = 32           # d_embedding
    C = 16           # n_concepts
    K = 5            # n_classes

    key = jax.random.PRNGKey(0)
    k_emb, k_cav, k_icpt, k_wc, k_bc, k_wr, k_br = jax.random.split(key, 7)

    emb = jax.random.normal(k_emb, (B, D), dtype=jnp.float32)
    cavs = jax.random.normal(k_cav, (C, D), dtype=jnp.float32)
    intercepts = jax.random.normal(k_icpt, (C, 1), dtype=jnp.float32)
    # norms are positive (L2 norms of CAVs in the original code path).
    norms = jnp.linalg.norm(cavs, axis=1, keepdims=True)         # (C, 1)

    wc = 0.1 * jax.random.normal(k_wc, (K, C), dtype=jnp.float32)
    bc = 0.1 * jax.random.normal(k_bc, (K,), dtype=jnp.float32)
    wr = 0.1 * jax.random.normal(k_wr, (K, D), dtype=jnp.float32)
    br = 0.1 * jax.random.normal(k_br, (K,), dtype=jnp.float32)

    ref_out, ref_dist = reference_forward(
        emb, cavs, intercepts, norms, wc, bc, wr, br)

    # --- f32 MXU operands: tight parity with the PyTorch reference ---------
    params_f32 = prepare_hybrid_cbm_params(
        cavs, intercepts, norms, wc, bc, wr, br, compute_dtype=jnp.float32)
    out, dist = posthoc_hybrid_cbm_forward(emb, params_f32, block_b=128)
    jax.block_until_ready((out, dist))

    assert out.shape == (B, K) and dist.shape == (B, C)
    assert jnp.allclose(out, ref_out, atol=1e-4, rtol=1e-4)
    assert jnp.allclose(dist, ref_dist, atol=1e-4, rtol=1e-4)

    # --- default bf16 MXU operands: looser tolerance (quantized operands) --
    params_bf16 = prepare_hybrid_cbm_params(
        cavs, intercepts, norms, wc, bc, wr, br)   # compute_dtype=bf16 default
    out_bf, dist_bf = posthoc_hybrid_cbm_forward(emb, params_bf16, block_b=128)
    jax.block_until_ready((out_bf, dist_bf))

    assert out_bf.shape == (B, K) and dist_bf.shape == (B, C)
    assert jnp.allclose(out_bf, ref_out, atol=5e-1, rtol=5e-2)
    assert jnp.allclose(dist_bf, ref_dist, atol=5e-1, rtol=5e-2)

    print("KERNEL_OK")
</pallas_src>

<mosaic_0001>
module attributes {stable_mosaic.version = 11 : i64} {
  func.func @_hybrid_cbm_kernel(%arg0: i32, %arg1: memref<8x32xf32, #tpu.memory_space<vmem>>, %arg2: memref<32x256xf32, #tpu.memory_space<vmem>>, %arg3: memref<1x256xf32, #tpu.memory_space<vmem>>, %arg4: memref<8x128xf32, #tpu.memory_space<vmem>>, %arg5: memref<8x128xf32, #tpu.memory_space<vmem>>) attributes {dimension_semantics = [#tpu.dimension_semantics<parallel>], iteration_bounds = array<i64: 1>, scalar_prefetch = 0 : i64, scratch_operands = 0 : i64, tpu.core_type = #tpu.core_type<tc>, window_params = [{transform_indices = @transform_0, window_bounds = array<i64: 8, 32>}, {pipeline_mode = #tpu.pipeline_mode<synchronous>, transform_indices = @transform_1, window_bounds = array<i64: 32, 256>}, {pipeline_mode = #tpu.pipeline_mode<synchronous>, transform_indices = @transform_2, window_bounds = array<i64: 1, 256>}, {transform_indices = @transform_3, window_bounds = array<i64: 8, 128>}, {transform_indices = @transform_4, window_bounds = array<i64: 8, 128>}]} {
    %c0 = arith.constant 0 : index
    %c0_0 = arith.constant 0 : index
    %0 = vector.load %arg1[%c0, %c0_0] : memref<8x32xf32, #tpu.memory_space<vmem>>, vector<8x32xf32>
    %c0_1 = arith.constant 0 : index
    %c0_2 = arith.constant 0 : index
    %1 = vector.load %arg2[%c0_1, %c0_2] : memref<32x256xf32, #tpu.memory_space<vmem>>, vector<32x256xf32>
    %cst = arith.constant dense<0.000000e+00> : vector<8x256xf32>
    %2 = tpu.matmul %0, %1, %cst {dimension_numbers = #tpu.dot_dimension_numbers<[1], [0], [0], [1], [0, 0, 1, 1], [], []>} : vector<8x32xf32>, vector<32x256xf32>, vector<8x256xf32> -> vector<8x256xf32>
    %c0_3 = arith.constant 0 : index
    %c0_4 = arith.constant 0 : index
    %3 = vector.load %arg3[%c0_3, %c0_4] : memref<1x256xf32, #tpu.memory_space<vmem>>, vector<1x256xf32>
    %4 = vector.broadcast %3 : vector<1x256xf32> to vector<8x256xf32>
    %5 = arith.addf %2, %4 : vector<8x256xf32>
    %6 = vector.extract_strided_slice %5 {offsets = [0, 0], sizes = [8, 128], strides = [1, 1]} : vector<8x256xf32> to vector<8x128xf32>
    %c0_5 = arith.constant 0 : index
    %c0_6 = arith.constant 0 : index
    %7 = vector.load %arg5[%c0_5, %c0_6] : memref<8x128xf32, #tpu.memory_space<vmem>>, vector<8x128xf32>
    tpu.vector_store %arg5[%c0_5, %c0_6], %6 {strides = array<i32>} : memref<8x128xf32, #tpu.memory_space<vmem>>, vector<8x128xf32>,
    %8 = vector.extract_strided_slice %5 {offsets = [0, 128], sizes = [8, 128], strides = [1, 1]} : vector<8x256xf32> to vector<8x128xf32>
    %c0_7 = arith.constant 0 : index
    %c0_8 = arith.constant 0 : index
    %9 = vector.load %arg4[%c0_7, %c0_8] : memref<8x128xf32, #tpu.memory_space<vmem>>, vector<8x128xf32>
    tpu.vector_store %arg4[%c0_7, %c0_8], %8 {strides = array<i32>} : memref<8x128xf32, #tpu.memory_space<vmem>>, vector<8x128xf32>,
    return
  }
  func.func @transform_0(%arg0: i32) -> (i32, i32) {
    %c0_i32 = arith.constant 0 : i32
    %c0_i32_0 = arith.constant 0 : i32
    return %arg0, %c0_i32 : i32, i32
  }
  func.func @transform_1(%arg0: i32) -> (i32, i32) {
    %c0_i32 = arith.constant 0 : i32
    %c0_i32_0 = arith.constant 0 : i32
    %c0_i32_1 = arith.constant 0 : i32
    return %c0_i32, %c0_i32_0 : i32, i32
  }
  func.func @transform_2(%arg0: i32) -> (i32, i32) {
    %c0_i32 = arith.constant 0 : i32
    %c0_i32_0 = arith.constant 0 : i32
    %c0_i32_1 = arith.constant 0 : i32
    return %c0_i32, %c0_i32_0 : i32, i32
  }
  func.func @transform_3(%arg0: i32) -> (i32, i32) {
    %c0_i32 = arith.constant 0 : i32
    %c0_i32_0 = arith.constant 0 : i32
    return %arg0, %c0_i32 : i32, i32
  }
  func.func @transform_4(%arg0: i32) -> (i32, i32) {
    %c0_i32 = arith.constant 0 : i32
    %c0_i32_0 = arith.constant 0 : i32
    return %arg0, %c0_i32 : i32, i32
  }
}

module attributes {stable_mosaic.version = 11 : i64} {
  func.func @_hybrid_cbm_kernel(%arg0: i32, %arg1: memref<8x32xf32, #tpu.memory_space<vmem>>, %arg2: memref<32x256xf32, #tpu.memory_space<vmem>>, %arg3: memref<1x256xf32, #tpu.memory_space<vmem>>, %arg4: memref<8x128xf32, #tpu.memory_space<vmem>>, %arg5: memref<8x128xf32, #tpu.memory_space<vmem>>) attributes {dimension_semantics = [#tpu.dimension_semantics<parallel>], iteration_bounds = array<i64: 1>, scalar_prefetch = 0 : i64, scratch_operands = 0 : i64, tpu.core_type = #tpu.core_type<tc>, window_params = [{transform_indices = @transform_0, window_bounds = array<i64: 8, 32>}, {pipeline_mode = #tpu.pipeline_mode<synchronous>, transform_indices = @transform_1, window_bounds = array<i64: 32, 256>}, {pipeline_mode = #tpu.pipeline_mode<synchronous>, transform_indices = @transform_2, window_bounds = array<i64: 1, 256>}, {transform_indices = @transform_3, window_bounds = array<i64: 8, 128>}, {transform_indices = @transform_4, window_bounds = array<i64: 8, 128>}]} {
    %c0 = arith.constant 0 : index
    %c0_0 = arith.constant 0 : index
    %0 = vector.load %arg1[%c0, %c0_0] : memref<8x32xf32, #tpu.memory_space<vmem>>, vector<8x32xf32>
    %c0_1 = arith.constant 0 : index
    %c0_2 = arith.constant 0 : index
    %1 = vector.load %arg2[%c0_1, %c0_2] : memref<32x256xf32, #tpu.memory_space<vmem>>, vector<32x256xf32>
    %cst = arith.constant dense<0.000000e+00> : vector<8x256xf32>
    %2 = tpu.matmul %0, %1, %cst {dimension_numbers = #tpu.dot_dimension_numbers<[1], [0], [0], [1], [0, 0, 1, 1], [], []>} : vector<8x32xf32>, vector<32x256xf32>, vector<8x256xf32> -> vector<8x256xf32>
    %c0_3 = arith.constant 0 : index
    %c0_4 = arith.constant 0 : index
    %3 = vector.load %arg3[%c0_3, %c0_4] : memref<1x256xf32, #tpu.memory_space<vmem>>, vector<1x256xf32>
    %4 = vector.broadcast %3 : vector<1x256xf32> to vector<8x256xf32>
    %5 = arith.addf %2, %4 : vector<8x256xf32>
    %6 = vector.extract_strided_slice %5 {offsets = [0, 0], sizes = [8, 128], strides = [1, 1]} : vector<8x256xf32> to vector<8x128xf32>
    %c0_5 = arith.constant 0 : index
    %c0_6 = arith.constant 0 : index
    %7 = vector.load %arg5[%c0_5, %c0_6] : memref<8x128xf32, #tpu.memory_space<vmem>>, vector<8x128xf32>
    tpu.vector_store %arg5[%c0_5, %c0_6], %6 {strides = array<i32>} : memref<8x128xf32, #tpu.memory_space<vmem>>, vector<8x128xf32>,
    %8 = vector.extract_strided_slice %5 {offsets = [0, 128], sizes = [8, 128], strides = [1, 1]} : vector<8x256xf32> to vector<8x128xf32>
    %c0_7 = arith.constant 0 : index
    %c0_8 = arith.constant 0 : index
    %9 = vector.load %arg4[%c0_7, %c0_8] : memref<8x128xf32, #tpu.memory_space<vmem>>, vector<8x128xf32>
    tpu.vector_store %arg4[%c0_7, %c0_8], %8 {strides = array<i32>} : memref<8x128xf32, #tpu.memory_space<vmem>>, vector<8x128xf32>,
    return
  }
  func.func @transform_0(%arg0: i32) -> (i32, i32) {
    %c0_i32 = arith.constant 0 : i32
    %c0_i32_0 = arith.constant 0 : i32
    return %arg0, %c0_i32 : i32, i32
  }
  func.func @transform_1(%arg0: i32) -> (i32, i32) {
    %c0_i32 = arith.constant 0 : i32
    %c0_i32_0 = arith.constant 0 : i32
    %c0_i32_1 = arith.constant 0 : i32
    return %c0_i32, %c0_i32_0 : i32, i32
  }
  func.func @transform_2(%arg0: i32) -> (i32, i32) {
    %c0_i32 = arith.constant 0 : i32
    %c0_i32_0 = arith.constant 0 : i32
    %c0_i32_1 = arith.constant 0 : i32
    return %c0_i32, %c0_i32_0 : i32, i32
  }
  func.func @transform_3(%arg0: i32) -> (i32, i32) {
    %c0_i32 = arith.constant 0 : i32
    %c0_i32_0 = arith.constant 0 : i32
    return %arg0, %c0_i32 : i32, i32
  }
  func.func @transform_4(%arg0: i32) -> (i32, i32) {
    %c0_i32 = arith.constant 0 : i32
    %c0_i32_0 = arith.constant 0 : i32
    return %arg0, %c0_i32 : i32, i32
  }
}

</mosaic_0001>

<llo_original>
// kernel: tpu_custom_call.1
$region0: #{tpu_custom_call.1}
  #allocation0 [shape = 'u32[]', space=smem, size = 0x4, offset = 0x4, fixed_abs, tag = 'smem constant byte address 0x4 - core index']
  #allocation1 [shape = 'u32[144,128]{1,0:T(1,128)}', space=vmem, size = 0x12000, scoped, tag = 'internal scratch']
  %s0 = inlined_call_operand.hbm [shape: f32[8,32], index: 0, kind: input, shape index: {}]
  %s1 = inlined_call_operand.hbm [shape: f32[32,256], index: 1, kind: input, shape index: {}]
  %s2 = inlined_call_operand.vmem [shape: f32[1,256], index: 2, kind: input, shape index: {}]
  %s3 = inlined_call_operand.hbm [shape: f32[8,128], index: 3, kind: output, shape index: {0}]
  %s4 = inlined_call_operand.hbm [shape: f32[8,128], index: 4, kind: output, shape index: {1}]
  %5 = xla_tuple %s3, %s4
  %s6 = sld [smem:[#allocation0]]
  $region38: #{tpu_custom_call.1} parent=0
    _
  %s8 = ssub.s32 1, %s6
  %s9 = scalar_select 0, %s8, %s6
  $region1: #{tpu_custom_call.1} parent=0
    #allocation2 [shape = 'u8[4096]{0}', space=vmem, size = 0x1000, scoped, tag = 'input window, operand 0, single buffered']
    #allocation3 [shape = 's32[1]{0}', space=sflag, size = 0x4, scoped, tag = 'scoped memory for tpu_custom_call.1']
    #allocation4 [shape = 's32[1]{0}', space=sflag, size = 0x4, scoped, tag = 'scoped memory for tpu_custom_call.1']
    #allocation5 [shape = 'u8[32768]{0}', space=vmem, size = 0x8000, scoped, tag = 'input window, operand 1, single buffered']
    #allocation6 [shape = 's32[1]{0}', space=sflag, size = 0x4, scoped, tag = 'scoped memory for tpu_custom_call.1']
    #allocation7 [shape = 'u8[4096]{0}', space=vmem, size = 0x1000, scoped, tag = 'output window, operand 0, single buffered']
    #allocation8 [shape = 'u8[4096]{0}', space=vmem, size = 0x1000, scoped, tag = 'output window, operand 1, single buffered']
    #allocation9 [shape = 's32[1]{0}', space=sflag, size = 0x4, scoped, tag = 'scoped memory for tpu_custom_call.1']
    %10 = vsyncpa [#allocation3], 0
    %11 = vsyncpa [#allocation6], 0
    %12 = vsyncpa [#allocation4], 0
    %13 = vsyncpa [#allocation9], 0
    // Predicated region
    $region2: #{tpu_custom_call.1} parent=1 // pred_check
      _
    $region3: #{tpu_custom_call.1} parent=1 // pred_check_branch
      %15 = sbr.rel (0) target = $region5
    $region4: #{tpu_custom_call.1} parent=1 // pred_region
      %s17 = ssub.s32 128, 128
      %18 = vsyncadd [#allocation3], %s17
      %s20 = sshll.u32 [#allocation2], 4
      %s21 = int_to_ptr.vmem [resolvable:$true] %s20
      %23 = dma.hbm_to_vmem [thread:$0]  %s0, 128, %s21, [#allocation3]
    $region5: #{tpu_custom_call.1} parent=1 // pred_fallthru
      _
    // Predicated region
    $region6: #{tpu_custom_call.1} parent=1 // pred_check
      _
    $region7: #{tpu_custom_call.1} parent=1 // pred_check_branch
      %25 = sbr.rel (0) target = $region9
    $region8: #{tpu_custom_call.1} parent=1 // pred_region
      %s27 = ssub.s32 1024, 1024
      %28 = vsyncadd [#allocation6], %s27
      %s29 = sshll.u32 [#allocation5], 4
      %s30 = int_to_ptr.vmem [resolvable:$true] %s29
      %35 = dma.hbm_to_vmem [thread:$0]  %s1, 1024, %s30, [#allocation6], 256, 256, 16
    $region9: #{tpu_custom_call.1} parent=1 // pred_fallthru
      _
    // Predicated region
    $region10: #{tpu_custom_call.1} parent=1 // pred_check
      _
    $region11: #{tpu_custom_call.1} parent=1 // pred_check_branch
      %37 = sbr.rel (0) target = $region13
    $region12: #{tpu_custom_call.1} parent=1 // pred_region
      _
    $region13: #{tpu_custom_call.1} parent=1 // pred_fallthru
      _
    // Predicated region
    $region14: #{tpu_custom_call.1} parent=1 // pred_check
      _
    $region15: #{tpu_custom_call.1} parent=1 // pred_check_branch
      %39 = sbr.rel (0) target = $region17
    $region16: #{tpu_custom_call.1} parent=1 // pred_region
      %40 = dma.done [#allocation3], 128
    $region17: #{tpu_custom_call.1} parent=1 // pred_fallthru
      _
    // Predicated region
    $region18: #{tpu_custom_call.1} parent=1 // pred_check
      _
    $region19: #{tpu_custom_call.1} parent=1 // pred_check_branch
      %42 = sbr.rel (0) target = $region21
    $region20: #{tpu_custom_call.1} parent=1 // pred_region
      %43 = dma.done [#allocation6], 1024
    $region21: #{tpu_custom_call.1} parent=1 // pred_fallthru
      _
    %v44 = vld [vmem:[#allocation2] sm:$0xff]
    %v45 = vld [vmem:[#allocation5] sm:$0xff]
    %v46 = vld [vmem:[#allocation5 + $0x8] sm:$0xff]
    %v47 = vld [vmem:[#allocation5 + $0x10] sm:$0xff]
    %v48 = vld [vmem:[#allocation5 + $0x18] sm:$0xff]
    %v49 = vld [vmem:[#allocation5 + $0x20] sm:$0xff]
    %v50 = vld [vmem:[#allocation5 + $0x28] sm:$0xff]
    %v51 = vld [vmem:[#allocation5 + $0x30] sm:$0xff]
    %v52 = vld [vmem:[#allocation5 + $0x38] sm:$0xff]
    %v53 = vld [vmem:[%s2] sm:$0x3]
    %v55 = vlaneseq
    %v56 = vshrl.u32 %v55, 7
    %v57 = vsub.s32 0, %v56
    %v58 = vrot.slane %v53, %v57
    %v59 = vlaneseq
    %v60 = vshrl.u32 %v59, 7
    %v61 = vsub.s32 1, %v60
    %v62 = vrot.slane %v53, %v61
    %vm65 = vcmask 261120
    %v67 = vsel %vm65, %v44, 0
    %69 = vmatprep.subr.mxu0 %v46
    %70 = vmatpush1.msra.mxu0 %v45
    %71 = vmatprep.subr.mxu0 %v48
    %72 = vmatpush1.msra.mxu0 %v47
    %73 = vmatprep.subr.mxu0 %v50
    %74 = vmatpush1.msra.mxu0 %v49
    %75 = vmatprep.subr.mxu0 %v52
    %76 = vmatpush1.msra.mxu0 %v51
    %77 = vmatprep.subr.mxu0 0.0
    %78 = vmatpush1.msra.mxu0 0.0
    %79 = vmatprep.subr.mxu0 0.0
    %80 = vmatpush1.msra.mxu0 0.0
    %81 = vmatprep.subr.mxu0 0.0
    %82 = vmatpush1.msra.mxu0 0.0
    %83 = vmatprep.subr.mxu0 0.0
    %84 = vmatpush1.msra.mxu0 0.0
    %85 = vmatprep.subr.mxu0 0.0
    %86 = vmatpush1.msra.mxu0 0.0
    %87 = vmatprep.subr.mxu0 0.0
    %88 = vmatpush1.msra.mxu0 0.0
    %89 = vmatprep.subr.mxu0 0.0
    %90 = vmatpush1.msra.mxu0 0.0
    %91 = vmatprep.subr.mxu0 0.0
    %92 = vmatpush1.msra.mxu0 0.0
    %93 = vmatprep.subr.mxu0 0.0
    %94 = vmatpush1.msra.mxu0 0.0
    %95 = vmatprep.subr.mxu0 0.0
    %96 = vmatpush1.msra.mxu0 0.0
    %97 = vmatprep.subr.mxu0 0.0
    %98 = vmatpush1.msra.mxu0 0.0
    %99 = vmatprep.subr.mxu0 0.0
    %100 = vmatpush1.msra.mxu0 0.0
    %101 = vmatprep.subr.mxu0 0.0
    %102 = vmatpush1.msra.mxu0 0.0
    %103 = vmatprep.subr.mxu0 0.0
    %104 = vmatpush1.msra.mxu0 0.0
    %105 = vmatprep.subr.mxu0 0.0
    %106 = vmatpush1.msra.mxu0 0.0
    %107 = vmatprep.subr.mxu0 0.0
    %108 = vmatpush1.msra.mxu0 0.0
    %109 = vmatprep.subr.mxu0 0.0
    %110 = vmatpush1.msra.mxu0 0.0
    %111 = vmatprep.subr.mxu0 0.0
    %112 = vmatpush1.msra.mxu0 0.0
    %113 = vmatprep.subr.mxu0 0.0
    %114 = vmatpush1.msra.mxu0 0.0
    %115 = vmatprep.subr.mxu0 0.0
    %116 = vmatpush1.msra.mxu0 0.0
    %117 = vmatprep.subr.mxu0 0.0
    %118 = vmatpush1.msra.mxu0 0.0
    %119 = vmatprep.subr.mxu0 0.0
    %120 = vmatpush1.msra.mxu0 0.0
    %121 = vmatprep.subr.mxu0 0.0
    %122 = vmatpush1.msra.mxu0 0.0
    %123 = vmatprep.subr.mxu0 0.0
    %124 = vmatpush1.msra.mxu0 0.0
    %125 = vmatprep.subr.mxu0 0.0
    %126 = vmatpush1.msra.mxu0 0.0
    %127 = vmatprep.subr.mxu0 0.0
    %128 = vmatpush1.msra.mxu0 0.0
    %129 = vmatprep.subr.mxu0 0.0
    %130 = vmatpush1.msra.mxu0 0.0
    %131 = vmatprep.subr.mxu0 0.0
    %132 = vmatpush1.msra.mxu0 0.0
    %133 = vmatprep.mubr.f32.mxu0 0.0
    %134 = vmatmul.mubr.f32.gmra.mrb[0].mxu0 %v67
    %v135 = vpop.f32.mrb[0].mxu0
    %v136 = vadd.f32 %v58, %v135
    %v137 = vpop.f32.mrb[0].mxu0
    %v138 = vadd.f32 %v62, %v137
    %139 = vdwg.mxu0
    %140 = vst [vmem:[#allocation8] sm:$0xff] %v136
    %141 = vst [vmem:[#allocation7] sm:$0xff] %v138
    // Predicated region
    $region22: #{tpu_custom_call.1} parent=1 // pred_check
      _
    $region23: #{tpu_custom_call.1} parent=1 // pred_check_branch
      %143 = sbr.rel (0) target = $region25
    $region24: #{tpu_custom_call.1} parent=1 // pred_region
      %s145 = ssub.s32 128, 128
      %146 = vsyncadd [#allocation4], %s145
      %s148 = sshll.u32 [#allocation7], 4
      %s149 = int_to_ptr.vmem [resolvable:$true] %s148
      %151 = dma.vmem_to_hbm [thread:$0]  %s149, 128, %s3, [#allocation4]
    $region25: #{tpu_custom_call.1} parent=1 // pred_fallthru
      _
    // Predicated region
    $region26: #{tpu_custom_call.1} parent=1 // pred_check
      _
    $region27: #{tpu_custom_call.1} parent=1 // pred_check_branch
      %153 = sbr.rel (0) target = $region29
    $region28: #{tpu_custom_call.1} parent=1 // pred_region
      %s155 = ssub.s32 128, 128
      %156 = vsyncadd [#allocation9], %s155
      %s158 = sshll.u32 [#allocation8], 4
      %s159 = int_to_ptr.vmem [resolvable:$true] %s158
      %161 = dma.vmem_to_hbm [thread:$0]  %s159, 128, %s4, [#allocation9]
    $region29: #{tpu_custom_call.1} parent=1 // pred_fallthru
      _
    // Predicated region
    $region30: #{tpu_custom_call.1} parent=1 // pred_check
      _
    $region31: #{tpu_custom_call.1} parent=1 // pred_check_branch
      %163 = sbr.rel (0) target = $region33
    $region32: #{tpu_custom_call.1} parent=1 // pred_region
      %164 = dma.done [#allocation4], 128
    $region33: #{tpu_custom_call.1} parent=1 // pred_fallthru
      _
    // Predicated region
    $region34: #{tpu_custom_call.1} parent=1 // pred_check
      _
    $region35: #{tpu_custom_call.1} parent=1 // pred_check_branch
      %166 = sbr.rel (0) target = $region37
    $region36: #{tpu_custom_call.1} parent=1 // pred_region
      %167 = dma.done [#allocation9], 128
    $region37: #{tpu_custom_call.1} parent=1 // pred_fallthru
      _
    %168 = vsyncpa [#allocation3], 1
    %169 = vsyncpa [#allocation6], 1
    %170 = vsyncpa [#allocation4], 1
    %171 = vsyncpa [#allocation9], 1

// kernel: tpu_custom_call.1
$region0: #{tpu_custom_call.1}
  #allocation0 [shape = 'u32[]', space=smem, size = 0x4, offset = 0x4, fixed_abs, tag = 'smem constant byte address 0x4 - core index']
  #allocation1 [shape = 'u32[144,128]{1,0:T(1,128)}', space=vmem, size = 0x12000, scoped, tag = 'internal scratch']
  %s0 = inlined_call_operand.hbm [shape: f32[8,32], index: 0, kind: input, shape index: {}]
  %s1 = inlined_call_operand.hbm [shape: f32[32,256], index: 1, kind: input, shape index: {}]
  %s2 = inlined_call_operand.vmem [shape: f32[1,256], index: 2, kind: input, shape index: {}]
  %s3 = inlined_call_operand.hbm [shape: f32[8,128], index: 3, kind: output, shape index: {0}]
  %s4 = inlined_call_operand.hbm [shape: f32[8,128], index: 4, kind: output, shape index: {1}]
  %5 = xla_tuple %s3, %s4
  %s6 = sld [smem:[#allocation0]]
  $region38: #{tpu_custom_call.1} parent=0
    _
  %s8 = ssub.s32 1, %s6
  %s9 = scalar_select 0, %s8, %s6
  $region1: #{tpu_custom_call.1} parent=0
    #allocation2 [shape = 'u8[4096]{0}', space=vmem, size = 0x1000, scoped, tag = 'input window, operand 0, single buffered']
    #allocation3 [shape = 's32[1]{0}', space=sflag, size = 0x4, scoped, tag = 'scoped memory for tpu_custom_call.1']
    #allocation4 [shape = 's32[1]{0}', space=sflag, size = 0x4, scoped, tag = 'scoped memory for tpu_custom_call.1']
    #allocation5 [shape = 'u8[32768]{0}', space=vmem, size = 0x8000, scoped, tag = 'input window, operand 1, single buffered']
    #allocation6 [shape = 's32[1]{0}', space=sflag, size = 0x4, scoped, tag = 'scoped memory for tpu_custom_call.1']
    #allocation7 [shape = 'u8[4096]{0}', space=vmem, size = 0x1000, scoped, tag = 'output window, operand 0, single buffered']
    #allocation8 [shape = 'u8[4096]{0}', space=vmem, size = 0x1000, scoped, tag = 'output window, operand 1, single buffered']
    #allocation9 [shape = 's32[1]{0}', space=sflag, size = 0x4, scoped, tag = 'scoped memory for tpu_custom_call.1']
    %10 = vsyncpa [#allocation3], 0
    %11 = vsyncpa [#allocation6], 0
    %12 = vsyncpa [#allocation4], 0
    %13 = vsyncpa [#allocation9], 0
    // Predicated region
    $region2: #{tpu_custom_call.1} parent=1 // pred_check
      _
    $region3: #{tpu_custom_call.1} parent=1 // pred_check_branch
      %15 = sbr.rel (0) target = $region5
    $region4: #{tpu_custom_call.1} parent=1 // pred_region
      %s17 = ssub.s32 128, 128
      %18 = vsyncadd [#allocation3], %s17
      %s20 = sshll.u32 [#allocation2], 4
      %s21 = int_to_ptr.vmem [resolvable:$true] %s20
      %23 = dma.hbm_to_vmem [thread:$0]  %s0, 128, %s21, [#allocation3]
    $region5: #{tpu_custom_call.1} parent=1 // pred_fallthru
      _
    // Predicated region
    $region6: #{tpu_custom_call.1} parent=1 // pred_check
      _
    $region7: #{tpu_custom_call.1} parent=1 // pred_check_branch
      %25 = sbr.rel (0) target = $region9
    $region8: #{tpu_custom_call.1} parent=1 // pred_region
      %s27 = ssub.s32 1024, 1024
      %28 = vsyncadd [#allocation6], %s27
      %s29 = sshll.u32 [#allocation5], 4
      %s30 = int_to_ptr.vmem [resolvable:$true] %s29
      %35 = dma.hbm_to_vmem [thread:$0]  %s1, 1024, %s30, [#allocation6], 256, 256, 16
    $region9: #{tpu_custom_call.1} parent=1 // pred_fallthru
      _
    // Predicated region
    $region10: #{tpu_custom_call.1} parent=1 // pred_check
      _
    $region11: #{tpu_custom_call.1} parent=1 // pred_check_branch
      %37 = sbr.rel (0) target = $region13
    $region12: #{tpu_custom_call.1} parent=1 // pred_region
      _
    $region13: #{tpu_custom_call.1} parent=1 // pred_fallthru
      _
    // Predicated region
    $region14: #{tpu_custom_call.1} parent=1 // pred_check
      _
    $region15: #{tpu_custom_call.1} parent=1 // pred_check_branch
      %39 = sbr.rel (0) target = $region17
    $region16: #{tpu_custom_call.1} parent=1 // pred_region
      %40 = dma.done [#allocation3], 128
    $region17: #{tpu_custom_call.1} parent=1 // pred_fallthru
      _
    // Predicated region
    $region18: #{tpu_custom_call.1} parent=1 // pred_check
      _
    $region19: #{tpu_custom_call.1} parent=1 // pred_check_branch
      %42 = sbr.rel (0) target = $region21
    $region20: #{tpu_custom_call.1} parent=1 // pred_region
      %43 = dma.done [#allocation6], 1024
    $region21: #{tpu_custom_call.1} parent=1 // pred_fallthru
      _
    %v44 = vld [vmem:[#allocation2] sm:$0xff]
    %v45 = vld [vmem:[#allocation5] sm:$0xff]
    %v46 = vld [vmem:[#allocation5 + $0x8] sm:$0xff]
    %v47 = vld [vmem:[#allocation5 + $0x10] sm:$0xff]
    %v48 = vld [vmem:[#allocation5 + $0x18] sm:$0xff]
    %v49 = vld [vmem:[#allocation5 + $0x20] sm:$0xff]
    %v50 = vld [vmem:[#allocation5 + $0x28] sm:$0xff]
    %v51 = vld [vmem:[#allocation5 + $0x30] sm:$0xff]
    %v52 = vld [vmem:[#allocation5 + $0x38] sm:$0xff]
    %v53 = vld [vmem:[%s2] sm:$0x3]
    %v55 = vlaneseq
    %v56 = vshrl.u32 %v55, 7
    %v57 = vsub.s32 0, %v56
    %v58 = vrot.slane %v53, %v57
    %v59 = vlaneseq
    %v60 = vshrl.u32 %v59, 7
    %v61 = vsub.s32 1, %v60
    %v62 = vrot.slane %v53, %v61
    %vm65 = vcmask 261120
    %v67 = vsel %vm65, %v44, 0
    %69 = vmatprep.subr.mxu0 %v46
    %70 = vmatpush1.msra.mxu0 %v45
    %71 = vmatprep.subr.mxu0 %v48
    %72 = vmatpush1.msra.mxu0 %v47
    %73 = vmatprep.subr.mxu0 %v50
    %74 = vmatpush1.msra.mxu0 %v49
    %75 = vmatprep.subr.mxu0 %v52
    %76 = vmatpush1.msra.mxu0 %v51
    %77 = vmatprep.subr.mxu0 0.0
    %78 = vmatpush1.msra.mxu0 0.0
    %79 = vmatprep.subr.mxu0 0.0
    %80 = vmatpush1.msra.mxu0 0.0
    %81 = vmatprep.subr.mxu0 0.0
    %82 = vmatpush1.msra.mxu0 0.0
    %83 = vmatprep.subr.mxu0 0.0
    %84 = vmatpush1.msra.mxu0 0.0
    %85 = vmatprep.subr.mxu0 0.0
    %86 = vmatpush1.msra.mxu0 0.0
    %87 = vmatprep.subr.mxu0 0.0
    %88 = vmatpush1.msra.mxu0 0.0
    %89 = vmatprep.subr.mxu0 0.0
    %90 = vmatpush1.msra.mxu0 0.0
    %91 = vmatprep.subr.mxu0 0.0
    %92 = vmatpush1.msra.mxu0 0.0
    %93 = vmatprep.subr.mxu0 0.0
    %94 = vmatpush1.msra.mxu0 0.0
    %95 = vmatprep.subr.mxu0 0.0
    %96 = vmatpush1.msra.mxu0 0.0
    %97 = vmatprep.subr.mxu0 0.0
    %98 = vmatpush1.msra.mxu0 0.0
    %99 = vmatprep.subr.mxu0 0.0
    %100 = vmatpush1.msra.mxu0 0.0
    %101 = vmatprep.subr.mxu0 0.0
    %102 = vmatpush1.msra.mxu0 0.0
    %103 = vmatprep.subr.mxu0 0.0
    %104 = vmatpush1.msra.mxu0 0.0
    %105 = vmatprep.subr.mxu0 0.0
    %106 = vmatpush1.msra.mxu0 0.0
    %107 = vmatprep.subr.mxu0 0.0
    %108 = vmatpush1.msra.mxu0 0.0
    %109 = vmatprep.subr.mxu0 0.0
    %110 = vmatpush1.msra.mxu0 0.0
    %111 = vmatprep.subr.mxu0 0.0
    %112 = vmatpush1.msra.mxu0 0.0
    %113 = vmatprep.subr.mxu0 0.0
    %114 = vmatpush1.msra.mxu0 0.0
    %115 = vmatprep.subr.mxu0 0.0
    %116 = vmatpush1.msra.mxu0 0.0
    %117 = vmatprep.subr.mxu0 0.0
    %118 = vmatpush1.msra.mxu0 0.0
    %119 = vmatprep.subr.mxu0 0.0
    %120 = vmatpush1.msra.mxu0 0.0
    %121 = vmatprep.subr.mxu0 0.0
    %122 = vmatpush1.msra.mxu0 0.0
    %123 = vmatprep.subr.mxu0 0.0
    %124 = vmatpush1.msra.mxu0 0.0
    %125 = vmatprep.subr.mxu0 0.0
    %126 = vmatpush1.msra.mxu0 0.0
    %127 = vmatprep.subr.mxu0 0.0
    %128 = vmatpush1.msra.mxu0 0.0
    %129 = vmatprep.subr.mxu0 0.0
    %130 = vmatpush1.msra.mxu0 0.0
    %131 = vmatprep.subr.mxu0 0.0
    %132 = vmatpush1.msra.mxu0 0.0
    %133 = vmatprep.mubr.f32.mxu0 0.0
    %134 = vmatmul.mubr.f32.gmra.mrb[0].mxu0 %v67
    %v135 = vpop.f32.mrb[0].mxu0
    %v136 = vadd.f32 %v58, %v135
    %v137 = vpop.f32.mrb[0].mxu0
    %v138 = vadd.f32 %v62, %v137
    %139 = vdwg.mxu0
    %140 = vst [vmem:[#allocation8] sm:$0xff] %v136
    %141 = vst [vmem:[#allocation7] sm:$0xff] %v138
    // Predicated region
    $region22: #{tpu_custom_call.1} parent=1 // pred_check
      _
    $region23: #{tpu_custom_call.1} parent=1 // pred_check_branch
      %143 = sbr.rel (0) target = $region25
    $region24: #{tpu_custom_call.1} parent=1 // pred_region
      %s145 = ssub.s32 128, 128
      %146 = vsyncadd [#allocation4], %s145
      %s148 = sshll.u32 [#allocation7], 4
      %s149 = int_to_ptr.vmem [resolvable:$true] %s148
      %151 = dma.vmem_to_hbm [thread:$0]  %s149, 128, %s3, [#allocation4]
    $region25: #{tpu_custom_call.1} parent=1 // pred_fallthru
      _
    // Predicated region
    $region26: #{tpu_custom_call.1} parent=1 // pred_check
      _
    $region27: #{tpu_custom_call.1} parent=1 // pred_check_branch
      %153 = sbr.rel (0) target = $region29
    $region28: #{tpu_custom_call.1} parent=1 // pred_region
      %s155 = ssub.s32 128, 128
      %156 = vsyncadd [#allocation9], %s155
      %s158 = sshll.u32 [#allocation8], 4
      %s159 = int_to_ptr.vmem [resolvable:$true] %s158
      %161 = dma.vmem_to_hbm [thread:$0]  %s159, 128, %s4, [#allocation9]
    $region29: #{tpu_custom_call.1} parent=1 // pred_fallthru
      _
    // Predicated region
    $region30: #{tpu_custom_call.1} parent=1 // pred_check
      _
    $region31: #{tpu_custom_call.1} parent=1 // pred_check_branch
      %163 = sbr.rel (0) target = $region33
    $region32: #{tpu_custom_call.1} parent=1 // pred_region
      %164 = dma.done [#allocation4], 128
    $region33: #{tpu_custom_call.1} parent=1 // pred_fallthru
      _
    // Predicated region
    $region34: #{tpu_custom_call.1} parent=1 // pred_check
      _
    $region35: #{tpu_custom_call.1} parent=1 // pred_check_branch
      %166 = sbr.rel (0) target = $region37
    $region36: #{tpu_custom_call.1} parent=1 // pred_region
      %167 = dma.done [#allocation9], 128
    $region37: #{tpu_custom_call.1} parent=1 // pred_fallthru
      _
    %168 = vsyncpa [#allocation3], 1
    %169 = vsyncpa [#allocation6], 1
    %170 = vsyncpa [#allocation4], 1
    %171 = vsyncpa [#allocation9], 1

</llo_original>
